<compile_context>
chip_gen: v6e
topology: v6e:2x2x1
jax: 0.10.0
libtpu: 0.0.40
codegen_flags: <defaults>
</compile_context>

<pallas_src>
import functools

import jax
import jax.numpy as jnp
import numpy as np
from jax import lax
from jax.experimental import pallas as pl
from jax.experimental.pallas import tpu as pltpu

LN_EPS = 1e-5    # nn.LayerNorm default
NUM_LEVELS = 4   # input + 3 pooling layers (fixed by the module)


def _layer_norm(y, g32, b32, out_dtype):
    """Row-wise LayerNorm over d_model (biased variance, eps inside sqrt)."""
    y32 = y.astype(jnp.float32)
    mean = jnp.mean(y32, axis=-1, keepdims=True)
    cent = y32 - mean
    var = jnp.mean(cent * cent, axis=-1, keepdims=True)
    return (cent * lax.rsqrt(var + LN_EPS) * g32 + b32).astype(out_dtype)


def _strided_window_max(ref, l_in, w):
    """Non-overlapping max over windows of `w` rows of ref[:, :l_in, :].

    `w` sublane-strided loads folded through jnp.maximum: the sublane axis is
    never reshaped down to size w (no relayout, pure VPU vmax).  Floor
    semantics (truncate the tail) match nn.MaxPool1d.
    """
    l_out = l_in // w
    out = ref[:, pl.ds(0, l_out, stride=w), :]
    for off in range(1, w):
        out = jnp.maximum(out, ref[:, pl.ds(off, l_out, stride=w), :])
    return out


def _maxpool_cscm_kernel(x_ref, g_ref, b_ref, o_hbm,
                         buf0, buf1, buf2, buf3, cur_ref, sems,
                         *, windows, chunk_lens, level_offsets, block_b,
                         num_chunks):
    i = pl.program_id(0)            # batch-block index   ("parallel")
    j = pl.program_id(1)            # L-chunk index       ("arbitrary")
    slot = lax.rem(j, 2)            # output double-buffer slot
    bufs = (buf0, buf1, buf2, buf3)
    D = x_ref.shape[-1]

    def level_dma(k, s, jj):
        """Async-copy descriptor: level-k scratch (slot s) -> output chunk jj."""
        rows = chunk_lens[k]
        start = level_offsets[k] + jj * rows
        if level_offsets[k] % 8 == 0 and rows % 8 == 0:
            start = pl.multiple_of(start, 8)      # 8-sublane aligned level slab
        dst = o_hbm.at[pl.ds(i * block_b, block_b), pl.ds(start, rows), :]
        return pltpu.make_async_copy(bufs[k].at[s], dst, sems.at[s, k])

    # 1) Before reusing this slot, drain the copies issued two chunks ago.
    @pl.when(j >= 2)
    def _():
        for k in range(NUM_LEVELS):
            level_dma(k, slot, j - 2).wait()

    # 2) Compute every pyramid level of this chunk into the slot's scratch.
    g32 = g_ref[...].reshape(1, 1, D).astype(jnp.float32)
    b32 = b_ref[...].reshape(1, 1, D).astype(jnp.float32)
    out_dt = buf0.dtype

    # level 0: the chunk itself.
    buf0[slot] = _layer_norm(x_ref[...], g32, b32, out_dt)
    # level 1: pooled straight from the input block (stays in input dtype).
    v = _strided_window_max(x_ref, chunk_lens[0], windows[0])
    buf1[slot] = _layer_norm(v, g32, b32, out_dt)
    # levels 2..3: stage the raw pooled rows in VMEM and strided-load from there.
    cur_ref[:, 0:chunk_lens[1], :] = v
    v = _strided_window_max(cur_ref, chunk_lens[1], windows[1])
    buf2[slot] = _layer_norm(v, g32, b32, out_dt)
    cur_ref[:, 0:chunk_lens[2], :] = v
    v = _strided_window_max(cur_ref, chunk_lens[2], windows[2])
    buf3[slot] = _layer_norm(v, g32, b32, out_dt)

    # 3) Kick off this chunk's stores (overlap with the next chunk's compute).
    for k in range(NUM_LEVELS):
        level_dma(k, slot, j).start()

    # 4) End of this batch-block's L sweep: drain everything still in flight so
    #    scratch can be reused at the next batch block and no DMA is pending at
    #    kernel exit.
    @pl.when(j == num_chunks - 1)
    def _():
        for k in range(NUM_LEVELS):
            level_dma(k, slot, j).wait()
        if num_chunks >= 2:
            for k in range(NUM_LEVELS):
                level_dma(k, 1 - slot, j - 1).wait()


def maxpool_construct(x, window_size, gamma, beta, *,
                      block_b=None, chunk=None, input_buffers=None):
    """x: (B, L, D) -> (B, L + L//w0 + L//(w0*w1) + L//(w0*w1*w2), D)."""
    B, L0, D = x.shape
    if isinstance(window_size, (list, tuple)):
        ws = list(window_size)
        assert len(ws) == 3
    else:
        ws = [window_size] * 3
    assert all(w >= 1 for w in ws)
    prod_ws = ws[0] * ws[1] * ws[2]

    lengths = [L0]
    for w in ws:
        nxt = lengths[-1] // w
        assert nxt >= 1, "sequence too short for the pooling pyramid"
        lengths.append(nxt)
    Lt = sum(lengths)
    level_offsets = tuple(int(sum(lengths[:k])) for k in range(NUM_LEVELS))

    out_dtype = x.dtype
    in_isz = x.dtype.itemsize
    out_isz = jnp.dtype(out_dtype).itemsize

    # ---- generation-aware VMEM budgets -------------------------------------
    try:
        vmem_cap = int(pltpu.get_tpu_info().vmem_capacity_bytes)
    except Exception:
        vmem_cap = 64 << 20                 # conservative (v7x-sized) fallback
    vmem_limit = (vmem_cap * 3) // 4        # ~96 MiB on 128-MiB parts, ~48 MiB on v7x
    budget = (vmem_cap * 3) // 8            # ~48 MiB / ~24 MiB working-set target

    def level_lens(c):
        ls = [c]
        for w in ws:
            ls.append(ls[-1] // w)
        return ls

    def per_b_bytes(c):
        c_tot = sum(level_lens(c))
        in_b = 2 * c * D * in_isz              # double-buffered input tile
        out_b = 2 * c_tot * D * out_isz        # 2-slot output scratch
        tmp_b = c_tot * D * (in_isz + 2 * 4)   # cur staging + f32 LN temporaries
        return in_b + out_b + tmp_b

    # ---- L-chunk size: multiple of 8*prod(ws) so pooling is block-local and
    #      every level slab stays 8-sublane aligned; fall back to the whole
    #      sequence when L is not divisible (toy shapes). ----------------------
    align = 8 * prod_ws
    if chunk is None:
        chunk = L0
        if L0 % align == 0:
            sweet = min(budget, 16 << 20)      # per-batch-element tile sweet spot
            if per_b_bytes(L0) > sweet:
                m = L0 // align
                best = align
                for k in range(1, m + 1):
                    if m % k == 0 and per_b_bytes(align * k) <= sweet:
                        best = align * k
                chunk = best
        # TODO(synk): also chunk when L is a multiple of prod(ws) but not of
        # 8*prod(ws) (slabs would be unaligned but still block-local).
    if chunk != L0:
        assert L0 % chunk == 0 and chunk % prod_ws == 0, (
            "chunk must divide L and be a multiple of prod(window_size)")
    num_chunks = L0 // chunk
    chunk_lens = tuple(int(v) for v in level_lens(chunk))
    assert all(lengths[k] == num_chunks * chunk_lens[k] for k in range(NUM_LEVELS))

    # ---- batch block: fill the budget, but keep >= 2 parallel grid steps for
    #      v7x's two TensorCores whenever B >= 2. -----------------------------
    if block_b is None:
        bb = max(1, min(B, budget // max(1, per_b_bytes(chunk))))
        if B >= 2:
            bb = min(bb, B // 2)
        bb = max(1, bb)
        while B % bb:
            bb -= 1
        block_b = bb
    assert B % block_b == 0

    kernel = functools.partial(
        _maxpool_cscm_kernel,
        windows=tuple(ws), chunk_lens=chunk_lens,
        level_offsets=level_offsets, block_b=block_b, num_chunks=num_chunks)

    x_spec_kwargs = {}
    if input_buffers is not None:
        # v7x knob: with very small chunks at 3.2 TB/s the kernel can become
        # DMA-latency bound; a third input buffer hides the exposed issue/wait.
        x_spec_kwargs["pipeline_mode"] = pl.Buffered(input_buffers)
    x_spec = pl.BlockSpec((block_b, chunk, D), lambda i, j: (i, j, 0),
                          **x_spec_kwargs)

    grid_spec = pltpu.PrefetchScalarGridSpec(
        num_scalar_prefetch=0,
        grid=(B // block_b, num_chunks),
        in_specs=[
            x_spec,
            pl.BlockSpec((1, D), lambda i, j: (0, 0)),
            pl.BlockSpec((1, D), lambda i, j: (0, 0)),
        ],
        out_specs=pl.BlockSpec(memory_space=pl.ANY),   # stored via manual DMA
        scratch_shapes=[
            pltpu.VMEM((2, block_b, chunk_lens[0], D), out_dtype),
            pltpu.VMEM((2, block_b, chunk_lens[1], D), out_dtype),
            pltpu.VMEM((2, block_b, chunk_lens[2], D), out_dtype),
            pltpu.VMEM((2, block_b, chunk_lens[3], D), out_dtype),
            pltpu.VMEM((block_b, chunk_lens[1], D), x.dtype),   # raw pooled staging
            pltpu.SemaphoreType.DMA((2, NUM_LEVELS)),
        ],
    )

    bytes_accessed = B * L0 * D * in_isz + B * Lt * D * out_isz + 2 * D * 4
    cost = pl.CostEstimate(
        flops=int(B * Lt * D * 8),        # pooling maxes + LayerNorm arithmetic
        transcendentals=int(B * Lt),      # one rsqrt per output row
        bytes_accessed=int(bytes_accessed))

    return pl.pallas_call(
        kernel,
        out_shape=jax.ShapeDtypeStruct((B, Lt, D), out_dtype),
        grid_spec=grid_spec,
        compiler_params=pltpu.CompilerParams(
            dimension_semantics=("parallel", "arbitrary"),
            vmem_limit_bytes=int(vmem_limit)),
        cost_estimate=cost,
    )(x,
      gamma.reshape(1, D).astype(jnp.float32),
      beta.reshape(1, D).astype(jnp.float32))


def _reference(x, window_size, gamma, beta):
    """Pure-JAX reference matching the PyTorch MaxPooling_Construct forward."""
    ws = (list(window_size) if isinstance(window_size, (list, tuple))
          else [window_size] * 3)
    outs = [x]
    cur = x
    for w in ws:
        B, L, D = cur.shape
        lo = L // w
        cur = cur[:, :lo * w, :].reshape(B, lo, w, D).max(axis=2)
        outs.append(cur)
    y = jnp.concatenate(outs, axis=1).astype(jnp.float32)
    mean = jnp.mean(y, axis=-1, keepdims=True)
    var = jnp.mean((y - mean) ** 2, axis=-1, keepdims=True)
    return ((y - mean) / jnp.sqrt(var + LN_EPS) * gamma + beta).astype(x.dtype)


if __name__ == "__main__":
    key = jax.random.PRNGKey(0)
    kx1, kx2, kx3, kg, kb = jax.random.split(key, 5)
    D = 128                     # d_model on the lane axis -> lane-dense stores
    window_size = 2

    gamma = 1.0 + 0.1 * jax.random.normal(kg, (D,), dtype=jnp.float32)
    beta = 0.05 * jax.random.normal(kb, (D,), dtype=jnp.float32)

    cases = [
        # (x, forced L-chunk)  -- chunk=None exercises the auto heuristic.
        (jax.random.normal(kx1, (2, 16, D), dtype=jnp.float32), None),  # single-chunk fallback
        (jax.random.normal(kx2, (2, 128, D), dtype=jnp.float32), 64),   # chunked path (2 L-chunks)
        (jax.random.normal(kx3, (2, 18, D), dtype=jnp.float32), None),  # MaxPool1d floor truncation
    ]
    for x, chunk in cases:
        out = maxpool_construct(x, window_size, gamma, beta, chunk=chunk)
        out = jax.block_until_ready(out)
        ref = _reference(x, window_size, gamma, beta)
        assert out.shape == ref.shape
        np.testing.assert_allclose(np.asarray(out), np.asarray(ref),
                                   rtol=1e-5, atol=1e-5)
    print("KERNEL_OK")
</pallas_src>

<mosaic_0001>
module attributes {stable_mosaic.version = 11 : i64} {
  func.func @_maxpool_cscm_kernel(%arg0: i32, %arg1: i32, %arg2: memref<1x16x128xf32, #tpu.memory_space<vmem>>, %arg3: memref<1x128xf32, #tpu.memory_space<vmem>>, %arg4: memref<1x128xf32, #tpu.memory_space<vmem>>, %arg5: memref<2x30x128xf32, #tpu.memory_space<any>>, %arg6: memref<2x1x16x128xf32, #tpu.memory_space<vmem>>, %arg7: memref<2x1x8x128xf32, #tpu.memory_space<vmem>>, %arg8: memref<2x1x4x128xf32, #tpu.memory_space<vmem>>, %arg9: memref<2x1x2x128xf32, #tpu.memory_space<vmem>>, %arg10: memref<1x8x128xf32, #tpu.memory_space<vmem>>, %arg11: memref<2x4x!tpu.dma_semaphore, #tpu.memory_space<semaphore_mem>>) attributes {dimension_semantics = [#tpu.dimension_semantics<parallel>, #tpu.dimension_semantics<arbitrary>], iteration_bounds = array<i64: 2, 1>, scalar_prefetch = 0 : i64, scratch_operands = 6 : i64, tpu.core_type = #tpu.core_type<tc>, window_params = [{transform_indices = @transform_0, window_bounds = array<i64: 1, 16, 128>}, {pipeline_mode = #tpu.pipeline_mode<synchronous>, transform_indices = @transform_1, window_bounds = array<i64: 1, 128>}, {pipeline_mode = #tpu.pipeline_mode<synchronous>, transform_indices = @transform_2, window_bounds = array<i64: 1, 128>}, {}]} {
    %c2_i32 = arith.constant 2 : i32
    %0 = arith.remsi %arg1, %c2_i32 : i32
    %c2_i32_0 = arith.constant 2 : i32
    %1 = arith.cmpi sge, %arg1, %c2_i32_0 : i32
    %2 = arith.extui %1 : i1 to i32
    %c0_i32 = arith.constant 0 : i32
    %3 = arith.cmpi ne, %2, %c0_i32 : i32
    scf.if %3 {
      %c2_i32_88 = arith.constant 2 : i32
      %153 = arith.subi %arg1, %c2_i32_88 : i32
      %c16_i32_89 = arith.constant 16 : i32
      %154 = arith.muli %153, %c16_i32_89 : i32
      %c0_i32_90 = arith.constant 0 : i32
      %155 = arith.addi %c0_i32_90, %154 : i32
      %156 = tpu.assume_multiple %155, 8 : i32
      %c1_i32_91 = arith.constant 1 : i32
      %157 = arith.muli %arg0, %c1_i32_91 : i32
      %c0_i32_92 = arith.constant 0 : i32
      %c0_i32_93 = arith.constant 0 : i32
      %c0_i32_94 = arith.constant 0 : i32
      %c0_i32_95 = arith.constant 0 : i32
      %158 = tpu.memref_slice %arg6[%0, %c0_i32_93, %c0_i32_94, %c0_i32_95] : memref<2x1x16x128xf32, #tpu.memory_space<vmem>> -> memref<1x1x16x128xf32, #tpu.memory_space<vmem>>
      %159 = tpu.memref_squeeze %158 : memref<1x1x16x128xf32, #tpu.memory_space<vmem>> -> memref<1x16x128xf32, #tpu.memory_space<vmem>>
      %c0_i32_96 = arith.constant 0 : i32
      %160 = tpu.memref_slice %arg5[%157, %156, %c0_i32_96] : memref<2x30x128xf32, #tpu.memory_space<any>> -> memref<1x16x128xf32, #tpu.memory_space<any>>
      %161 = tpu.memref_slice %arg11[%0, %c0_i32_92] : memref<2x4x!tpu.dma_semaphore, #tpu.memory_space<semaphore_mem>> -> memref<1x1x!tpu.dma_semaphore, #tpu.memory_space<semaphore_mem>>
      %162 = tpu.memref_squeeze %161 : memref<1x1x!tpu.dma_semaphore, #tpu.memory_space<semaphore_mem>> -> memref<!tpu.dma_semaphore, #tpu.memory_space<semaphore_mem>>
      tpu.wait_dma2 semaphore(%162 : memref<!tpu.dma_semaphore, #tpu.memory_space<semaphore_mem>>) src(%159 : memref<1x16x128xf32, #tpu.memory_space<vmem>>) dst(%160 : memref<1x16x128xf32, #tpu.memory_space<any>>)
      %c2_i32_97 = arith.constant 2 : i32
      %163 = arith.subi %arg1, %c2_i32_97 : i32
      %c8_i32_98 = arith.constant 8 : i32
      %164 = arith.muli %163, %c8_i32_98 : i32
      %c16_i32_99 = arith.constant 16 : i32
      %165 = arith.addi %c16_i32_99, %164 : i32
      %166 = tpu.assume_multiple %165, 8 : i32
      %c1_i32_100 = arith.constant 1 : i32
      %167 = arith.muli %arg0, %c1_i32_100 : i32
      %c1_i32_101 = arith.constant 1 : i32
      %c0_i32_102 = arith.constant 0 : i32
      %c0_i32_103 = arith.constant 0 : i32
      %c0_i32_104 = arith.constant 0 : i32
      %168 = tpu.memref_slice %arg7[%0, %c0_i32_102, %c0_i32_103, %c0_i32_104] : memref<2x1x8x128xf32, #tpu.memory_space<vmem>> -> memref<1x1x8x128xf32, #tpu.memory_space<vmem>>
      %169 = tpu.memref_squeeze %168 : memref<1x1x8x128xf32, #tpu.memory_space<vmem>> -> memref<1x8x128xf32, #tpu.memory_space<vmem>>
      %c0_i32_105 = arith.constant 0 : i32
      %170 = tpu.memref_slice %arg5[%167, %166, %c0_i32_105] : memref<2x30x128xf32, #tpu.memory_space<any>> -> memref<1x8x128xf32, #tpu.memory_space<any>>
      %171 = tpu.memref_slice %arg11[%0, %c1_i32_101] : memref<2x4x!tpu.dma_semaphore, #tpu.memory_space<semaphore_mem>> -> memref<1x1x!tpu.dma_semaphore, #tpu.memory_space<semaphore_mem>>
      %172 = tpu.memref_squeeze %171 : memref<1x1x!tpu.dma_semaphore, #tpu.memory_space<semaphore_mem>> -> memref<!tpu.dma_semaphore, #tpu.memory_space<semaphore_mem>>
      tpu.wait_dma2 semaphore(%172 : memref<!tpu.dma_semaphore, #tpu.memory_space<semaphore_mem>>) src(%169 : memref<1x8x128xf32, #tpu.memory_space<vmem>>) dst(%170 : memref<1x8x128xf32, #tpu.memory_space<any>>)
      %c2_i32_106 = arith.constant 2 : i32
      %173 = arith.subi %arg1, %c2_i32_106 : i32
      %c4_i32_107 = arith.constant 4 : i32
      %174 = arith.muli %173, %c4_i32_107 : i32
      %c24_i32_108 = arith.constant 24 : i32
      %175 = arith.addi %c24_i32_108, %174 : i32
      %c1_i32_109 = arith.constant 1 : i32
      %176 = arith.muli %arg0, %c1_i32_109 : i32
      %c2_i32_110 = arith.constant 2 : i32
      %c0_i32_111 = arith.constant 0 : i32
      %c0_i32_112 = arith.constant 0 : i32
      %c0_i32_113 = arith.constant 0 : i32
      %177 = tpu.memref_slice %arg8[%0, %c0_i32_111, %c0_i32_112, %c0_i32_113] : memref<2x1x4x128xf32, #tpu.memory_space<vmem>> -> memref<1x1x4x128xf32, #tpu.memory_space<vmem>>
      %178 = tpu.memref_squeeze %177 : memref<1x1x4x128xf32, #tpu.memory_space<vmem>> -> memref<1x4x128xf32, #tpu.memory_space<vmem>>
      %c0_i32_114 = arith.constant 0 : i32
      %179 = tpu.memref_slice %arg5[%176, %175, %c0_i32_114] : memref<2x30x128xf32, #tpu.memory_space<any>> -> memref<1x4x128xf32, #tpu.memory_space<any>>
      %180 = tpu.memref_slice %arg11[%0, %c2_i32_110] : memref<2x4x!tpu.dma_semaphore, #tpu.memory_space<semaphore_mem>> -> memref<1x1x!tpu.dma_semaphore, #tpu.memory_space<semaphore_mem>>
      %181 = tpu.memref_squeeze %180 : memref<1x1x!tpu.dma_semaphore, #tpu.memory_space<semaphore_mem>> -> memref<!tpu.dma_semaphore, #tpu.memory_space<semaphore_mem>>
      tpu.wait_dma2 semaphore(%181 : memref<!tpu.dma_semaphore, #tpu.memory_space<semaphore_mem>>) src(%178 : memref<1x4x128xf32, #tpu.memory_space<vmem>>) dst(%179 : memref<1x4x128xf32, #tpu.memory_space<any>>)
      %c2_i32_115 = arith.constant 2 : i32
      %182 = arith.subi %arg1, %c2_i32_115 : i32
      %c2_i32_116 = arith.constant 2 : i32
      %183 = arith.muli %182, %c2_i32_116 : i32
      %c28_i32_117 = arith.constant 28 : i32
      %184 = arith.addi %c28_i32_117, %183 : i32
      %c1_i32_118 = arith.constant 1 : i32
      %185 = arith.muli %arg0, %c1_i32_118 : i32
      %c3_i32_119 = arith.constant 3 : i32
      %c0_i32_120 = arith.constant 0 : i32
      %c0_i32_121 = arith.constant 0 : i32
      %c0_i32_122 = arith.constant 0 : i32
      %186 = tpu.memref_slice %arg9[%0, %c0_i32_120, %c0_i32_121, %c0_i32_122] : memref<2x1x2x128xf32, #tpu.memory_space<vmem>> -> memref<1x1x2x128xf32, #tpu.memory_space<vmem>>
      %187 = tpu.memref_squeeze %186 : memref<1x1x2x128xf32, #tpu.memory_space<vmem>> -> memref<1x2x128xf32, #tpu.memory_space<vmem>>
      %c0_i32_123 = arith.constant 0 : i32
      %188 = tpu.memref_slice %arg5[%185, %184, %c0_i32_123] : memref<2x30x128xf32, #tpu.memory_space<any>> -> memref<1x2x128xf32, #tpu.memory_space<any>>
      %189 = tpu.memref_slice %arg11[%0, %c3_i32_119] : memref<2x4x!tpu.dma_semaphore, #tpu.memory_space<semaphore_mem>> -> memref<1x1x!tpu.dma_semaphore, #tpu.memory_space<semaphore_mem>>
      %190 = tpu.memref_squeeze %189 : memref<1x1x!tpu.dma_semaphore, #tpu.memory_space<semaphore_mem>> -> memref<!tpu.dma_semaphore, #tpu.memory_space<semaphore_mem>>
      tpu.wait_dma2 semaphore(%190 : memref<!tpu.dma_semaphore, #tpu.memory_space<semaphore_mem>>) src(%187 : memref<1x2x128xf32, #tpu.memory_space<vmem>>) dst(%188 : memref<1x2x128xf32, #tpu.memory_space<any>>)
    } else {
    }
    %c0 = arith.constant 0 : index
    %c0_1 = arith.constant 0 : index
    %4 = vector.load %arg3[%c0, %c0_1] : memref<1x128xf32, #tpu.memory_space<vmem>>, vector<1x128xf32>
    %5 = vector.shape_cast %4 : vector<1x128xf32> to vector<1x1x128xf32>
    %c0_2 = arith.constant 0 : index
    %c0_3 = arith.constant 0 : index
    %6 = vector.load %arg4[%c0_2, %c0_3] : memref<1x128xf32, #tpu.memory_space<vmem>>, vector<1x128xf32>
    %7 = vector.shape_cast %6 : vector<1x128xf32> to vector<1x1x128xf32>
    %c0_4 = arith.constant 0 : index
    %c0_5 = arith.constant 0 : index
    %c0_6 = arith.constant 0 : index
    %8 = vector.load %arg2[%c0_4, %c0_5, %c0_6] : memref<1x16x128xf32, #tpu.memory_space<vmem>>, vector<1x16x128xf32>
    %cst = arith.constant dense<0.000000e+00> : vector<1x16xf32>
    %9 = vector.multi_reduction <add>, %8, %cst [2] : vector<1x16x128xf32> to vector<1x16xf32>
    %10 = vector.shape_cast %9 : vector<1x16xf32> to vector<1x16x1xf32>
    %cst_7 = arith.constant 1.280000e+02 : f32
    %11 = vector.broadcast %cst_7 : f32 to vector<1x16x1xf32>
    %12 = arith.divf %10, %11 : vector<1x16x1xf32>
    %13 = vector.broadcast %12 : vector<1x16x1xf32> to vector<1x16x128xf32>
    %14 = arith.subf %8, %13 : vector<1x16x128xf32>
    %15 = arith.mulf %14, %14 : vector<1x16x128xf32>
    %cst_8 = arith.constant dense<0.000000e+00> : vector<1x16xf32>
    %16 = vector.multi_reduction <add>, %15, %cst_8 [2] : vector<1x16x128xf32> to vector<1x16xf32>
    %17 = vector.shape_cast %16 : vector<1x16xf32> to vector<1x16x1xf32>
    %cst_9 = arith.constant 1.280000e+02 : f32
    %18 = vector.broadcast %cst_9 : f32 to vector<1x16x1xf32>
    %19 = arith.divf %17, %18 : vector<1x16x1xf32>
    %cst_10 = arith.constant 9.99999974E-6 : f32
    %20 = vector.broadcast %cst_10 : f32 to vector<1x16x1xf32>
    %21 = arith.addf %19, %20 : vector<1x16x1xf32>
    %22 = math.rsqrt %21 : vector<1x16x1xf32>
    %23 = vector.broadcast %22 : vector<1x16x1xf32> to vector<1x16x128xf32>
    %24 = arith.mulf %14, %23 : vector<1x16x128xf32>
    %25 = vector.broadcast %5 : vector<1x1x128xf32> to vector<1x16x128xf32>
    %26 = arith.mulf %24, %25 : vector<1x16x128xf32>
    %27 = vector.broadcast %7 : vector<1x1x128xf32> to vector<1x16x128xf32>
    %28 = arith.addf %26, %27 : vector<1x16x128xf32>
    %29 = arith.index_cast %0 : i32 to index
    %c0_11 = arith.constant 0 : index
    %c0_12 = arith.constant 0 : index
    %c0_13 = arith.constant 0 : index
    %30 = vector.load %arg6[%29, %c0_11, %c0_12, %c0_13] : memref<2x1x16x128xf32, #tpu.memory_space<vmem>>, vector<1x1x16x128xf32>
    %31 = vector.shape_cast %30 : vector<1x1x16x128xf32> to vector<1x16x128xf32>
    %32 = vector.shape_cast %28 : vector<1x16x128xf32> to vector<1x1x16x128xf32>
    tpu.vector_store %arg6[%29, %c0_11, %c0_12, %c0_13], %32 {strides = array<i32>} : memref<2x1x16x128xf32, #tpu.memory_space<vmem>>, vector<1x1x16x128xf32>,
    %c0_14 = arith.constant 0 : index
    %c0_15 = arith.constant 0 : index
    %c0_16 = arith.constant 0 : index
    %33 = tpu.strided_load %arg2[%c0_14, %c0_15, %c0_16] {strides = array<i32: 1, 2, 1>} : memref<1x16x128xf32, #tpu.memory_space<vmem>>, vector<1x8x128xf32>
    %c0_17 = arith.constant 0 : index
    %c1 = arith.constant 1 : index
    %c0_18 = arith.constant 0 : index
    %34 = tpu.strided_load %arg2[%c0_17, %c1, %c0_18] {strides = array<i32: 1, 2, 1>} : memref<1x16x128xf32, #tpu.memory_space<vmem>>, vector<1x8x128xf32>
    %35 = arith.maximumf %33, %34 : vector<1x8x128xf32>
    %cst_19 = arith.constant dense<0.000000e+00> : vector<1x8xf32>
    %36 = vector.multi_reduction <add>, %35, %cst_19 [2] : vector<1x8x128xf32> to vector<1x8xf32>
    %37 = vector.shape_cast %36 : vector<1x8xf32> to vector<1x8x1xf32>
    %cst_20 = arith.constant 1.280000e+02 : f32
    %38 = vector.broadcast %cst_20 : f32 to vector<1x8x1xf32>
    %39 = arith.divf %37, %38 : vector<1x8x1xf32>
    %40 = vector.broadcast %39 : vector<1x8x1xf32> to vector<1x8x128xf32>
    %41 = arith.subf %35, %40 : vector<1x8x128xf32>
    %42 = arith.mulf %41, %41 : vector<1x8x128xf32>
    %cst_21 = arith.constant dense<0.000000e+00> : vector<1x8xf32>
    %43 = vector.multi_reduction <add>, %42, %cst_21 [2] : vector<1x8x128xf32> to vector<1x8xf32>
    %44 = vector.shape_cast %43 : vector<1x8xf32> to vector<1x8x1xf32>
    %cst_22 = arith.constant 1.280000e+02 : f32
    %45 = vector.broadcast %cst_22 : f32 to vector<1x8x1xf32>
    %46 = arith.divf %44, %45 : vector<1x8x1xf32>
    %cst_23 = arith.constant 9.99999974E-6 : f32
    %47 = vector.broadcast %cst_23 : f32 to vector<1x8x1xf32>
    %48 = arith.addf %46, %47 : vector<1x8x1xf32>
    %49 = math.rsqrt %48 : vector<1x8x1xf32>
    %50 = vector.broadcast %49 : vector<1x8x1xf32> to vector<1x8x128xf32>
    %51 = arith.mulf %41, %50 : vector<1x8x128xf32>
    %52 = vector.broadcast %5 : vector<1x1x128xf32> to vector<1x8x128xf32>
    %53 = arith.mulf %51, %52 : vector<1x8x128xf32>
    %54 = vector.broadcast %7 : vector<1x1x128xf32> to vector<1x8x128xf32>
    %55 = arith.addf %53, %54 : vector<1x8x128xf32>
    %56 = arith.index_cast %0 : i32 to index
    %c0_24 = arith.constant 0 : index
    %c0_25 = arith.constant 0 : index
    %c0_26 = arith.constant 0 : index
    %57 = vector.load %arg7[%56, %c0_24, %c0_25, %c0_26] : memref<2x1x8x128xf32, #tpu.memory_space<vmem>>, vector<1x1x8x128xf32>
    %58 = vector.shape_cast %57 : vector<1x1x8x128xf32> to vector<1x8x128xf32>
    %59 = vector.shape_cast %55 : vector<1x8x128xf32> to vector<1x1x8x128xf32>
    tpu.vector_store %arg7[%56, %c0_24, %c0_25, %c0_26], %59 {strides = array<i32>} : memref<2x1x8x128xf32, #tpu.memory_space<vmem>>, vector<1x1x8x128xf32>,
    %c0_27 = arith.constant 0 : index
    %c0_28 = arith.constant 0 : index
    %c0_29 = arith.constant 0 : index
    %60 = vector.load %arg10[%c0_27, %c0_28, %c0_29] : memref<1x8x128xf32, #tpu.memory_space<vmem>>, vector<1x8x128xf32>
    tpu.vector_store %arg10[%c0_27, %c0_28, %c0_29], %35 {strides = array<i32>} : memref<1x8x128xf32, #tpu.memory_space<vmem>>, vector<1x8x128xf32>,
    %c0_30 = arith.constant 0 : index
    %c0_31 = arith.constant 0 : index
    %c0_32 = arith.constant 0 : index
    %61 = tpu.strided_load %arg10[%c0_30, %c0_31, %c0_32] {strides = array<i32: 1, 2, 1>} : memref<1x8x128xf32, #tpu.memory_space<vmem>>, vector<1x4x128xf32>
    %c0_33 = arith.constant 0 : index
    %c1_34 = arith.constant 1 : index
    %c0_35 = arith.constant 0 : index
    %62 = tpu.strided_load %arg10[%c0_33, %c1_34, %c0_35] {strides = array<i32: 1, 2, 1>} : memref<1x8x128xf32, #tpu.memory_space<vmem>>, vector<1x4x128xf32>
    %63 = arith.maximumf %61, %62 : vector<1x4x128xf32>
    %cst_36 = arith.constant dense<0.000000e+00> : vector<1x4xf32>
    %64 = vector.multi_reduction <add>, %63, %cst_36 [2] : vector<1x4x128xf32> to vector<1x4xf32>
    %65 = vector.shape_cast %64 : vector<1x4xf32> to vector<1x4x1xf32>
    %cst_37 = arith.constant 1.280000e+02 : f32
    %66 = vector.broadcast %cst_37 : f32 to vector<1x4x1xf32>
    %67 = arith.divf %65, %66 : vector<1x4x1xf32>
    %68 = vector.broadcast %67 : vector<1x4x1xf32> to vector<1x4x128xf32>
    %69 = arith.subf %63, %68 : vector<1x4x128xf32>
    %70 = arith.mulf %69, %69 : vector<1x4x128xf32>
    %cst_38 = arith.constant dense<0.000000e+00> : vector<1x4xf32>
    %71 = vector.multi_reduction <add>, %70, %cst_38 [2] : vector<1x4x128xf32> to vector<1x4xf32>
    %72 = vector.shape_cast %71 : vector<1x4xf32> to vector<1x4x1xf32>
    %cst_39 = arith.constant 1.280000e+02 : f32
    %73 = vector.broadcast %cst_39 : f32 to vector<1x4x1xf32>
    %74 = arith.divf %72, %73 : vector<1x4x1xf32>
    %cst_40 = arith.constant 9.99999974E-6 : f32
    %75 = vector.broadcast %cst_40 : f32 to vector<1x4x1xf32>
    %76 = arith.addf %74, %75 : vector<1x4x1xf32>
    %77 = math.rsqrt %76 : vector<1x4x1xf32>
    %78 = vector.broadcast %77 : vector<1x4x1xf32> to vector<1x4x128xf32>
    %79 = arith.mulf %69, %78 : vector<1x4x128xf32>
    %80 = vector.broadcast %5 : vector<1x1x128xf32> to vector<1x4x128xf32>
    %81 = arith.mulf %79, %80 : vector<1x4x128xf32>
    %82 = vector.broadcast %7 : vector<1x1x128xf32> to vector<1x4x128xf32>
    %83 = arith.addf %81, %82 : vector<1x4x128xf32>
    %84 = arith.index_cast %0 : i32 to index
    %c0_41 = arith.constant 0 : index
    %c0_42 = arith.constant 0 : index
    %c0_43 = arith.constant 0 : index
    %85 = vector.load %arg8[%84, %c0_41, %c0_42, %c0_43] : memref<2x1x4x128xf32, #tpu.memory_space<vmem>>, vector<1x1x4x128xf32>
    %86 = vector.shape_cast %85 : vector<1x1x4x128xf32> to vector<1x4x128xf32>
    %87 = vector.shape_cast %83 : vector<1x4x128xf32> to vector<1x1x4x128xf32>
    tpu.vector_store %arg8[%84, %c0_41, %c0_42, %c0_43], %87 {strides = array<i32>} : memref<2x1x4x128xf32, #tpu.memory_space<vmem>>, vector<1x1x4x128xf32>,
    %c0_44 = arith.constant 0 : index
    %c0_45 = arith.constant 0 : index
    %c0_46 = arith.constant 0 : index
    %88 = vector.load %arg10[%c0_44, %c0_45, %c0_46] : memref<1x8x128xf32, #tpu.memory_space<vmem>>, vector<1x4x128xf32>
    tpu.vector_store %arg10[%c0_44, %c0_45, %c0_46], %63 {strides = array<i32>} : memref<1x8x128xf32, #tpu.memory_space<vmem>>, vector<1x4x128xf32>,
    %c0_47 = arith.constant 0 : index
    %c0_48 = arith.constant 0 : index
    %c0_49 = arith.constant 0 : index
    %89 = tpu.strided_load %arg10[%c0_47, %c0_48, %c0_49] {strides = array<i32: 1, 2, 1>} : memref<1x8x128xf32, #tpu.memory_space<vmem>>, vector<1x2x128xf32>
    %c0_50 = arith.constant 0 : index
    %c1_51 = arith.constant 1 : index
    %c0_52 = arith.constant 0 : index
    %90 = tpu.strided_load %arg10[%c0_50, %c1_51, %c0_52] {strides = array<i32: 1, 2, 1>} : memref<1x8x128xf32, #tpu.memory_space<vmem>>, vector<1x2x128xf32>
    %91 = arith.maximumf %89, %90 : vector<1x2x128xf32>
    %cst_53 = arith.constant dense<0.000000e+00> : vector<1x2xf32>
    %92 = vector.multi_reduction <add>, %91, %cst_53 [2] : vector<1x2x128xf32> to vector<1x2xf32>
    %93 = vector.shape_cast %92 : vector<1x2xf32> to vector<1x2x1xf32>
    %cst_54 = arith.constant 1.280000e+02 : f32
    %94 = vector.broadcast %cst_54 : f32 to vector<1x2x1xf32>
    %95 = arith.divf %93, %94 : vector<1x2x1xf32>
    %96 = vector.broadcast %95 : vector<1x2x1xf32> to vector<1x2x128xf32>
    %97 = arith.subf %91, %96 : vector<1x2x128xf32>
    %98 = arith.mulf %97, %97 : vector<1x2x128xf32>
    %cst_55 = arith.constant dense<0.000000e+00> : vector<1x2xf32>
    %99 = vector.multi_reduction <add>, %98, %cst_55 [2] : vector<1x2x128xf32> to vector<1x2xf32>
    %100 = vector.shape_cast %99 : vector<1x2xf32> to vector<1x2x1xf32>
    %cst_56 = arith.constant 1.280000e+02 : f32
    %101 = vector.broadcast %cst_56 : f32 to vector<1x2x1xf32>
    %102 = arith.divf %100, %101 : vector<1x2x1xf32>
    %cst_57 = arith.constant 9.99999974E-6 : f32
    %103 = vector.broadcast %cst_57 : f32 to vector<1x2x1xf32>
    %104 = arith.addf %102, %103 : vector<1x2x1xf32>
    %105 = math.rsqrt %104 : vector<1x2x1xf32>
    %106 = vector.broadcast %105 : vector<1x2x1xf32> to vector<1x2x128xf32>
    %107 = arith.mulf %97, %106 : vector<1x2x128xf32>
    %108 = vector.broadcast %5 : vector<1x1x128xf32> to vector<1x2x128xf32>
    %109 = arith.mulf %107, %108 : vector<1x2x128xf32>
    %110 = vector.broadcast %7 : vector<1x1x128xf32> to vector<1x2x128xf32>
    %111 = arith.addf %109, %110 : vector<1x2x128xf32>
    %112 = arith.index_cast %0 : i32 to index
    %c0_58 = arith.constant 0 : index
    %c0_59 = arith.constant 0 : index
    %c0_60 = arith.constant 0 : index
    %113 = vector.load %arg9[%112, %c0_58, %c0_59, %c0_60] : memref<2x1x2x128xf32, #tpu.memory_space<vmem>>, vector<1x1x2x128xf32>
    %114 = vector.shape_cast %113 : vector<1x1x2x128xf32> to vector<1x2x128xf32>
    %115 = vector.shape_cast %111 : vector<1x2x128xf32> to vector<1x1x2x128xf32>
    tpu.vector_store %arg9[%112, %c0_58, %c0_59, %c0_60], %115 {strides = array<i32>} : memref<2x1x2x128xf32, #tpu.memory_space<vmem>>, vector<1x1x2x128xf32>,
    %c16_i32 = arith.constant 16 : i32
    %116 = arith.muli %arg1, %c16_i32 : i32
    %c0_i32_61 = arith.constant 0 : i32
    %117 = arith.addi %c0_i32_61, %116 : i32
    %118 = tpu.assume_multiple %117, 8 : i32
    %c1_i32 = arith.constant 1 : i32
    %119 = arith.muli %arg0, %c1_i32 : i32
    %c0_i32_62 = arith.constant 0 : i32
    %c0_i32_63 = arith.constant 0 : i32
    %c0_i32_64 = arith.constant 0 : i32
    %c0_i32_65 = arith.constant 0 : i32
    %120 = tpu.memref_slice %arg6[%0, %c0_i32_63, %c0_i32_64, %c0_i32_65] : memref<2x1x16x128xf32, #tpu.memory_space<vmem>> -> memref<1x1x16x128xf32, #tpu.memory_space<vmem>>
    %121 = tpu.memref_squeeze %120 : memref<1x1x16x128xf32, #tpu.memory_space<vmem>> -> memref<1x16x128xf32, #tpu.memory_space<vmem>>
    %c0_i32_66 = arith.constant 0 : i32
    %122 = tpu.memref_slice %arg5[%119, %118, %c0_i32_66] : memref<2x30x128xf32, #tpu.memory_space<any>> -> memref<1x16x128xf32, #tpu.memory_space<any>>
    %123 = tpu.memref_slice %arg11[%0, %c0_i32_62] : memref<2x4x!tpu.dma_semaphore, #tpu.memory_space<semaphore_mem>> -> memref<1x1x!tpu.dma_semaphore, #tpu.memory_space<semaphore_mem>>
    %124 = tpu.memref_squeeze %123 : memref<1x1x!tpu.dma_semaphore, #tpu.memory_space<semaphore_mem>> -> memref<!tpu.dma_semaphore, #tpu.memory_space<semaphore_mem>>
    tpu.enqueue_dma source(%121 : memref<1x16x128xf32, #tpu.memory_space<vmem>>) target(%122 : memref<1x16x128xf32, #tpu.memory_space<any>>) target_semaphore(%124 : memref<!tpu.dma_semaphore, #tpu.memory_space<semaphore_mem>>)
    %c8_i32 = arith.constant 8 : i32
    %125 = arith.muli %arg1, %c8_i32 : i32
    %c16_i32_67 = arith.constant 16 : i32
    %126 = arith.addi %c16_i32_67, %125 : i32
    %127 = tpu.assume_multiple %126, 8 : i32
    %c1_i32_68 = arith.constant 1 : i32
    %128 = arith.muli %arg0, %c1_i32_68 : i32
    %c1_i32_69 = arith.constant 1 : i32
    %c0_i32_70 = arith.constant 0 : i32
    %c0_i32_71 = arith.constant 0 : i32
    %c0_i32_72 = arith.constant 0 : i32
    %129 = tpu.memref_slice %arg7[%0, %c0_i32_70, %c0_i32_71, %c0_i32_72] : memref<2x1x8x128xf32, #tpu.memory_space<vmem>> -> memref<1x1x8x128xf32, #tpu.memory_space<vmem>>
    %130 = tpu.memref_squeeze %129 : memref<1x1x8x128xf32, #tpu.memory_space<vmem>> -> memref<1x8x128xf32, #tpu.memory_space<vmem>>
    %c0_i32_73 = arith.constant 0 : i32
    %131 = tpu.memref_slice %arg5[%128, %127, %c0_i32_73] : memref<2x30x128xf32, #tpu.memory_space<any>> -> memref<1x8x128xf32, #tpu.memory_space<any>>
    %132 = tpu.memref_slice %arg11[%0, %c1_i32_69] : memref<2x4x!tpu.dma_semaphore, #tpu.memory_space<semaphore_mem>> -> memref<1x1x!tpu.dma_semaphore, #tpu.memory_space<semaphore_mem>>
    %133 = tpu.memref_squeeze %132 : memref<1x1x!tpu.dma_semaphore, #tpu.memory_space<semaphore_mem>> -> memref<!tpu.dma_semaphore, #tpu.memory_space<semaphore_mem>>
    tpu.enqueue_dma source(%130 : memref<1x8x128xf32, #tpu.memory_space<vmem>>) target(%131 : memref<1x8x128xf32, #tpu.memory_space<any>>) target_semaphore(%133 : memref<!tpu.dma_semaphore, #tpu.memory_space<semaphore_mem>>)
    %c4_i32 = arith.constant 4 : i32
    %134 = arith.muli %arg1, %c4_i32 : i32
    %c24_i32 = arith.constant 24 : i32
    %135 = arith.addi %c24_i32, %134 : i32
    %c1_i32_74 = arith.constant 1 : i32
    %136 = arith.muli %arg0, %c1_i32_74 : i32
    %c2_i32_75 = arith.constant 2 : i32
    %c0_i32_76 = arith.constant 0 : i32
    %c0_i32_77 = arith.constant 0 : i32
    %c0_i32_78 = arith.constant 0 : i32
    %137 = tpu.memref_slice %arg8[%0, %c0_i32_76, %c0_i32_77, %c0_i32_78] : memref<2x1x4x128xf32, #tpu.memory_space<vmem>> -> memref<1x1x4x128xf32, #tpu.memory_space<vmem>>
    %138 = tpu.memref_squeeze %137 : memref<1x1x4x128xf32, #tpu.memory_space<vmem>> -> memref<1x4x128xf32, #tpu.memory_space<vmem>>
    %c0_i32_79 = arith.constant 0 : i32
    %139 = tpu.memref_slice %arg5[%136, %135, %c0_i32_79] : memref<2x30x128xf32, #tpu.memory_space<any>> -> memref<1x4x128xf32, #tpu.memory_space<any>>
    %140 = tpu.memref_slice %arg11[%0, %c2_i32_75] : memref<2x4x!tpu.dma_semaphore, #tpu.memory_space<semaphore_mem>> -> memref<1x1x!tpu.dma_semaphore, #tpu.memory_space<semaphore_mem>>
    %141 = tpu.memref_squeeze %140 : memref<1x1x!tpu.dma_semaphore, #tpu.memory_space<semaphore_mem>> -> memref<!tpu.dma_semaphore, #tpu.memory_space<semaphore_mem>>
    tpu.enqueue_dma source(%138 : memref<1x4x128xf32, #tpu.memory_space<vmem>>) target(%139 : memref<1x4x128xf32, #tpu.memory_space<any>>) target_semaphore(%141 : memref<!tpu.dma_semaphore, #tpu.memory_space<semaphore_mem>>)
    %c2_i32_80 = arith.constant 2 : i32
    %142 = arith.muli %arg1, %c2_i32_80 : i32
    %c28_i32 = arith.constant 28 : i32
    %143 = arith.addi %c28_i32, %142 : i32
    %c1_i32_81 = arith.constant 1 : i32
    %144 = arith.muli %arg0, %c1_i32_81 : i32
    %c3_i32 = arith.constant 3 : i32
    %c0_i32_82 = arith.constant 0 : i32
    %c0_i32_83 = arith.constant 0 : i32
    %c0_i32_84 = arith.constant 0 : i32
    %145 = tpu.memref_slice %arg9[%0, %c0_i32_82, %c0_i32_83, %c0_i32_84] : memref<2x1x2x128xf32, #tpu.memory_space<vmem>> -> memref<1x1x2x128xf32, #tpu.memory_space<vmem>>
    %146 = tpu.memref_squeeze %145 : memref<1x1x2x128xf32, #tpu.memory_space<vmem>> -> memref<1x2x128xf32, #tpu.memory_space<vmem>>
    %c0_i32_85 = arith.constant 0 : i32
    %147 = tpu.memref_slice %arg5[%144, %143, %c0_i32_85] : memref<2x30x128xf32, #tpu.memory_space<any>> -> memref<1x2x128xf32, #tpu.memory_space<any>>
    %148 = tpu.memref_slice %arg11[%0, %c3_i32] : memref<2x4x!tpu.dma_semaphore, #tpu.memory_space<semaphore_mem>> -> memref<1x1x!tpu.dma_semaphore, #tpu.memory_space<semaphore_mem>>
    %149 = tpu.memref_squeeze %148 : memref<1x1x!tpu.dma_semaphore, #tpu.memory_space<semaphore_mem>> -> memref<!tpu.dma_semaphore, #tpu.memory_space<semaphore_mem>>
    tpu.enqueue_dma source(%146 : memref<1x2x128xf32, #tpu.memory_space<vmem>>) target(%147 : memref<1x2x128xf32, #tpu.memory_space<any>>) target_semaphore(%149 : memref<!tpu.dma_semaphore, #tpu.memory_space<semaphore_mem>>)
    %c0_i32_86 = arith.constant 0 : i32
    %150 = arith.cmpi eq, %arg1, %c0_i32_86 : i32
    %151 = arith.extui %150 : i1 to i32
    %c0_i32_87 = arith.constant 0 : i32
    %152 = arith.cmpi ne, %151, %c0_i32_87 : i32
    scf.if %152 {
      %c16_i32_88 = arith.constant 16 : i32
      %153 = arith.muli %arg1, %c16_i32_88 : i32
      %c0_i32_89 = arith.constant 0 : i32
      %154 = arith.addi %c0_i32_89, %153 : i32
      %155 = tpu.assume_multiple %154, 8 : i32
      %c1_i32_90 = arith.constant 1 : i32
      %156 = arith.muli %arg0, %c1_i32_90 : i32
      %c0_i32_91 = arith.constant 0 : i32
      %c0_i32_92 = arith.constant 0 : i32
      %c0_i32_93 = arith.constant 0 : i32
      %c0_i32_94 = arith.constant 0 : i32
      %157 = tpu.memref_slice %arg6[%0, %c0_i32_92, %c0_i32_93, %c0_i32_94] : memref<2x1x16x128xf32, #tpu.memory_space<vmem>> -> memref<1x1x16x128xf32, #tpu.memory_space<vmem>>
      %158 = tpu.memref_squeeze %157 : memref<1x1x16x128xf32, #tpu.memory_space<vmem>> -> memref<1x16x128xf32, #tpu.memory_space<vmem>>
      %c0_i32_95 = arith.constant 0 : i32
      %159 = tpu.memref_slice %arg5[%156, %155, %c0_i32_95] : memref<2x30x128xf32, #tpu.memory_space<any>> -> memref<1x16x128xf32, #tpu.memory_space<any>>
      %160 = tpu.memref_slice %arg11[%0, %c0_i32_91] : memref<2x4x!tpu.dma_semaphore, #tpu.memory_space<semaphore_mem>> -> memref<1x1x!tpu.dma_semaphore, #tpu.memory_space<semaphore_mem>>
      %161 = tpu.memref_squeeze %160 : memref<1x1x!tpu.dma_semaphore, #tpu.memory_space<semaphore_mem>> -> memref<!tpu.dma_semaphore, #tpu.memory_space<semaphore_mem>>
      tpu.wait_dma2 semaphore(%161 : memref<!tpu.dma_semaphore, #tpu.memory_space<semaphore_mem>>) src(%158 : memref<1x16x128xf32, #tpu.memory_space<vmem>>) dst(%159 : memref<1x16x128xf32, #tpu.memory_space<any>>)
      %c8_i32_96 = arith.constant 8 : i32
      %162 = arith.muli %arg1, %c8_i32_96 : i32
      %c16_i32_97 = arith.constant 16 : i32
      %163 = arith.addi %c16_i32_97, %162 : i32
      %164 = tpu.assume_multiple %163, 8 : i32
      %c1_i32_98 = arith.constant 1 : i32
      %165 = arith.muli %arg0, %c1_i32_98 : i32
      %c1_i32_99 = arith.constant 1 : i32
      %c0_i32_100 = arith.constant 0 : i32
      %c0_i32_101 = arith.constant 0 : i32
      %c0_i32_102 = arith.constant 0 : i32
      %166 = tpu.memref_slice %arg7[%0, %c0_i32_100, %c0_i32_101, %c0_i32_102] : memref<2x1x8x128xf32, #tpu.memory_space<vmem>> -> memref<1x1x8x128xf32, #tpu.memory_space<vmem>>
      %167 = tpu.memref_squeeze %166 : memref<1x1x8x128xf32, #tpu.memory_space<vmem>> -> memref<1x8x128xf32, #tpu.memory_space<vmem>>
      %c0_i32_103 = arith.constant 0 : i32
      %168 = tpu.memref_slice %arg5[%165, %164, %c0_i32_103] : memref<2x30x128xf32, #tpu.memory_space<any>> -> memref<1x8x128xf32, #tpu.memory_space<any>>
      %169 = tpu.memref_slice %arg11[%0, %c1_i32_99] : memref<2x4x!tpu.dma_semaphore, #tpu.memory_space<semaphore_mem>> -> memref<1x1x!tpu.dma_semaphore, #tpu.memory_space<semaphore_mem>>
      %170 = tpu.memref_squeeze %169 : memref<1x1x!tpu.dma_semaphore, #tpu.memory_space<semaphore_mem>> -> memref<!tpu.dma_semaphore, #tpu.memory_space<semaphore_mem>>
      tpu.wait_dma2 semaphore(%170 : memref<!tpu.dma_semaphore, #tpu.memory_space<semaphore_mem>>) src(%167 : memref<1x8x128xf32, #tpu.memory_space<vmem>>) dst(%168 : memref<1x8x128xf32, #tpu.memory_space<any>>)
      %c4_i32_104 = arith.constant 4 : i32
      %171 = arith.muli %arg1, %c4_i32_104 : i32
      %c24_i32_105 = arith.constant 24 : i32
      %172 = arith.addi %c24_i32_105, %171 : i32
      %c1_i32_106 = arith.constant 1 : i32
      %173 = arith.muli %arg0, %c1_i32_106 : i32
      %c2_i32_107 = arith.constant 2 : i32
      %c0_i32_108 = arith.constant 0 : i32
      %c0_i32_109 = arith.constant 0 : i32
      %c0_i32_110 = arith.constant 0 : i32
      %174 = tpu.memref_slice %arg8[%0, %c0_i32_108, %c0_i32_109, %c0_i32_110] : memref<2x1x4x128xf32, #tpu.memory_space<vmem>> -> memref<1x1x4x128xf32, #tpu.memory_space<vmem>>
      %175 = tpu.memref_squeeze %174 : memref<1x1x4x128xf32, #tpu.memory_space<vmem>> -> memref<1x4x128xf32, #tpu.memory_space<vmem>>
      %c0_i32_111 = arith.constant 0 : i32
      %176 = tpu.memref_slice %arg5[%173, %172, %c0_i32_111] : memref<2x30x128xf32, #tpu.memory_space<any>> -> memref<1x4x128xf32, #tpu.memory_space<any>>
      %177 = tpu.memref_slice %arg11[%0, %c2_i32_107] : memref<2x4x!tpu.dma_semaphore, #tpu.memory_space<semaphore_mem>> -> memref<1x1x!tpu.dma_semaphore, #tpu.memory_space<semaphore_mem>>
      %178 = tpu.memref_squeeze %177 : memref<1x1x!tpu.dma_semaphore, #tpu.memory_space<semaphore_mem>> -> memref<!tpu.dma_semaphore, #tpu.memory_space<semaphore_mem>>
      tpu.wait_dma2 semaphore(%178 : memref<!tpu.dma_semaphore, #tpu.memory_space<semaphore_mem>>) src(%175 : memref<1x4x128xf32, #tpu.memory_space<vmem>>) dst(%176 : memref<1x4x128xf32, #tpu.memory_space<any>>)
      %c2_i32_112 = arith.constant 2 : i32
      %179 = arith.muli %arg1, %c2_i32_112 : i32
      %c28_i32_113 = arith.constant 28 : i32
      %180 = arith.addi %c28_i32_113, %179 : i32
      %c1_i32_114 = arith.constant 1 : i32
      %181 = arith.muli %arg0, %c1_i32_114 : i32
      %c3_i32_115 = arith.constant 3 : i32
      %c0_i32_116 = arith.constant 0 : i32
      %c0_i32_117 = arith.constant 0 : i32
      %c0_i32_118 = arith.constant 0 : i32
      %182 = tpu.memref_slice %arg9[%0, %c0_i32_116, %c0_i32_117, %c0_i32_118] : memref<2x1x2x128xf32, #tpu.memory_space<vmem>> -> memref<1x1x2x128xf32, #tpu.memory_space<vmem>>
      %183 = tpu.memref_squeeze %182 : memref<1x1x2x128xf32, #tpu.memory_space<vmem>> -> memref<1x2x128xf32, #tpu.memory_space<vmem>>
      %c0_i32_119 = arith.constant 0 : i32
      %184 = tpu.memref_slice %arg5[%181, %180, %c0_i32_119] : memref<2x30x128xf32, #tpu.memory_space<any>> -> memref<1x2x128xf32, #tpu.memory_space<any>>
      %185 = tpu.memref_slice %arg11[%0, %c3_i32_115] : memref<2x4x!tpu.dma_semaphore, #tpu.memory_space<semaphore_mem>> -> memref<1x1x!tpu.dma_semaphore, #tpu.memory_space<semaphore_mem>>
      %186 = tpu.memref_squeeze %185 : memref<1x1x!tpu.dma_semaphore, #tpu.memory_space<semaphore_mem>> -> memref<!tpu.dma_semaphore, #tpu.memory_space<semaphore_mem>>
      tpu.wait_dma2 semaphore(%186 : memref<!tpu.dma_semaphore, #tpu.memory_space<semaphore_mem>>) src(%183 : memref<1x2x128xf32, #tpu.memory_space<vmem>>) dst(%184 : memref<1x2x128xf32, #tpu.memory_space<any>>)
    } else {
    }
    return
  }
  func.func @transform_0(%arg0: i32, %arg1: i32) -> (i32, i32, i32) {
    %c0_i32 = arith.constant 0 : i32
    %c0_i32_0 = arith.constant 0 : i32
    return %arg0, %arg1, %c0_i32 : i32, i32, i32
  }
  func.func @transform_1(%arg0: i32, %arg1: i32) -> (i32, i32) {
    %c0_i32 = arith.constant 0 : i32
    %c0_i32_0 = arith.constant 0 : i32
    %c0_i32_1 = arith.constant 0 : i32
    return %c0_i32, %c0_i32_0 : i32, i32
  }
  func.func @transform_2(%arg0: i32, %arg1: i32) -> (i32, i32) {
    %c0_i32 = arith.constant 0 : i32
    %c0_i32_0 = arith.constant 0 : i32
    %c0_i32_1 = arith.constant 0 : i32
    return %c0_i32, %c0_i32_0 : i32, i32
  }
}

</mosaic_0001>

<llo_original>
// kernel: tpu_custom_call.1
$region0: #{tpu_custom_call.1}
  #allocation0 [shape = 'u32[]', space=smem, size = 0x4, offset = 0x4, fixed_abs, tag = 'smem constant byte address 0x4 - core index']
  #allocation1 [shape = 'u32[144,128]{1,0:T(1,128)}', space=vmem, size = 0x12000, scoped, tag = 'internal scratch']
  #allocation2 [shape = 'f32[2,1,16,128]{3,2,1,0:T(8,128)}', space=vmem, size = 0x4000, scoped, tag = 'scratch operand']
  #allocation3 [shape = 'f32[2,1,8,128]{3,2,1,0:T(8,128)}', space=vmem, size = 0x2000, scoped, tag = 'scratch operand']
  #allocation4 [shape = 'f32[2,1,4,128]{3,2,1,0:T(4,128)}', space=vmem, size = 0x1000, scoped, tag = 'scratch operand']
  #allocation5 [shape = 'f32[2,1,2,128]{3,2,1,0:T(2,128)}', space=vmem, size = 0x800, scoped, tag = 'scratch operand']
  #allocation6 [shape = 'f32[1,8,128]{2,1,0:T(8,128)}', space=vmem, size = 0x1000, scoped, tag = 'scratch operand']
  #allocation7 [shape = 's32[8]{0}', space=sflag, size = 0x20, scoped, tag = 'scratch operand']
  #allocation10 [shape = 's32[]', space=sflag, size = 0x4, offset = 0, fixed_abs, tag = 'sflag constant byte address 0x0 - dummy sync flag']
  #allocation11 [shape = 's32[]', space=sflag, size = 0x4, offset = 0, fixed_abs, tag = 'sflag constant byte address 0x0 - dummy sync flag']
  #allocation12 [shape = 's32[]', space=sflag, size = 0x4, offset = 0, fixed_abs, tag = 'sflag constant byte address 0x0 - dummy sync flag']
  #allocation13 [shape = 's32[]', space=sflag, size = 0x4, offset = 0, fixed_abs, tag = 'sflag constant byte address 0x0 - dummy sync flag']
  %s0 = inlined_call_operand.hbm [shape: f32[2,16,128], index: 0, kind: input, shape index: {}]
  %s1 = inlined_call_operand.vmem [shape: f32[1,128], index: 1, kind: input, shape index: {}]
  %s2 = inlined_call_operand.vmem [shape: f32[1,128], index: 2, kind: input, shape index: {}]
  %s3 = inlined_call_operand.vmem [shape: f32[2,30,128], index: 3, kind: output, shape index: {}]
  %s4 = sld [smem:[#allocation0]]
  $region173: #{tpu_custom_call.1} parent=0
    _
  %s6 = ssub.s32 1, %s4
  %s7 = scalar_select 0, %s6, %s4
  $region1: #{tpu_custom_call.1} parent=0
    #allocation8 [shape = 'u8[16384]{0}', space=vmem, size = 0x4000, scoped, tag = 'input window, operand 0']
    #allocation9 [shape = 's32[2]{0}', space=sflag, size = 0x8, scoped, tag = 'scoped memory for tpu_custom_call.1']
    %8 = vsyncpa [#allocation9], 0
    %s9 = scalar_lea.sflag [#allocation9], 1
    %10 = vsyncpa %s9, 0
    loop: start=0, step=1, limit=3
    $region2: #{tpu_custom_call.1} parent=1 // loop_pre_header
      _
    $region3: #{tpu_custom_call.1} parent=1 // loop_header
      %s12 = sphi 0, %s16
      %p13 = scmp.ge.s32.totalorder %s12, 3
      %s18 = sphi 0, %s28
      %s19 = sphi 0, %s24
      %s20 = sphi 0, %s18
      %s21 = sphi 0, %s19
      %s33 = sphi 0, %s35
      %s36 = sphi 0, %s33
      %s46 = sphi 0, %s36
      %s50 = sphi 0, %s50
      %s52 = sphi 0, %s50
      %s60 = sphi 0, %s52
      %s64 = sphi 0, %s64
      %s66 = sphi 0, %s64
      %s74 = sphi 0, %s66
    $region4: #{tpu_custom_call.1} parent=1 // loop_header_branch
      %15 = sbr.rel (%p13) target = $region8
    $region5: #{tpu_custom_call.1} parent=1 // loop_body
      %s17 = ssub.s32 %s12, 1
      %s22 = sadd.s32 1, %s19
      %p23 = scmp.ge.s32.totalorder %s22, 1
      %s24 = scalar_select %p23, 0, %s22
      %s25 = sadd.s32 1, %s18
      %s26 = scalar_select %p23, %s25, %s18
      %p27 = scmp.ge.s32.totalorder %s26, 2
      %s28 = scalar_select %p27, 0, %s26
      %s29 = ssub.s32 %s18, %s28
      %s30 = ssub.s32 %s19, %s24
      %s31 = sor.u32 %s29, %s30
      %p32 = scmp.eq.s32.totalorder %s31, 0
      %s34 = sadd.s32 %s33, 1
      %s35 = scalar_select %p32, %s33, %s34
      %p37 = pneg %p32
      %p38 = scmp.eq.s32.totalorder %s12, 1
      %p39 = por %p37, %p38
      %p40 = scmp.ne.s32.totalorder %s33, %s36
      %p41 = scmp.eq.s32.totalorder %s12, 0
      %p42 = por %p40, %p41
      %p43 = scmp.ne.s32.totalorder %s33, %s36
      %p44 = scmp.eq.s32.totalorder %s17, 1
      %p45 = por %p43, %p44
      %p47 = scmp.ne.s32.totalorder %s36, %s46
      %p48 = scmp.eq.s32.totalorder %s17, 0
      %p49 = por %p47, %p48
      %s51 = sadd.s32 %s50, 1
      %p53 = scmp.eq.s32.totalorder %s12, 1
      %p54 = scmp.ne.s32.totalorder %s50, %s52
      %p55 = scmp.eq.s32.totalorder %s12, 0
      %p56 = por %p54, %p55
      %p57 = scmp.ne.s32.totalorder %s50, %s52
      %p58 = scmp.eq.s32.totalorder %s17, 1
      %p59 = por %p57, %p58
      %p61 = scmp.ne.s32.totalorder %s52, %s60
      %p62 = scmp.eq.s32.totalorder %s17, 0
      %p63 = por %p61, %p62
      %s65 = sadd.s32 %s64, 1
      %p67 = scmp.eq.s32.totalorder %s12, 1
      %p68 = scmp.ne.s32.totalorder %s64, %s66
      %p69 = scmp.eq.s32.totalorder %s12, 0
      %p70 = por %p68, %p69
      %p71 = scmp.ne.s32.totalorder %s64, %s66
      %p72 = scmp.eq.s32.totalorder %s17, 1
      %p73 = por %p71, %p72
      %p75 = scmp.ne.s32.totalorder %s66, %s74
      %p76 = scmp.eq.s32.totalorder %s17, 0
      %p77 = por %p75, %p76
      %p78 = scmp.le.s32.totalorder 1, %s12
      // Predicated region
      $region9: #{tpu_custom_call.1} parent=5 // pred_check
        %p79 = pneg %p78
      $region10: #{tpu_custom_call.1} parent=5 // pred_check_branch
        %81 = sbr.rel (%p79) target = $region12
      $region11: #{tpu_custom_call.1} parent=5 // pred_region
        %s82 = ssub.s32 %s12, 1
        // Predicated region
        $region13: #{tpu_custom_call.1} parent=11 // pred_check
          %p83 = pneg %p63
        $region14: #{tpu_custom_call.1} parent=11 // pred_check_branch
          %85 = sbr.rel (%p83) target = $region16
        $region15: #{tpu_custom_call.1} parent=11 // pred_region
          _
        $region16: #{tpu_custom_call.1} parent=11 // pred_fallthru
          _
        // Predicated region
        $region17: #{tpu_custom_call.1} parent=11 // pred_check
          %p86 = pneg %p77
        $region18: #{tpu_custom_call.1} parent=11 // pred_check_branch
          %88 = sbr.rel (%p86) target = $region20
        $region19: #{tpu_custom_call.1} parent=11 // pred_region
          _
        $region20: #{tpu_custom_call.1} parent=11 // pred_fallthru
          _
      $region12: #{tpu_custom_call.1} parent=5 // pred_fallthru
        _
      %p89 = scmp.lt.s32.totalorder %s12, 2
      // Predicated region
      $region21: #{tpu_custom_call.1} parent=5 // pred_check
        %p90 = pneg %p89
      $region22: #{tpu_custom_call.1} parent=5 // pred_check_branch
        %92 = sbr.rel (%p90) target = $region24
      $region23: #{tpu_custom_call.1} parent=5 // pred_region
        // Predicated region
        $region25: #{tpu_custom_call.1} parent=23 // pred_check
          %p93 = pneg %p42
        $region26: #{tpu_custom_call.1} parent=23 // pred_check_branch
          %95 = sbr.rel (%p93) target = $region28
        $region27: #{tpu_custom_call.1} parent=23 // pred_region
          %s96 = sand.u32 %s33, 1
          %s97 = scalar_lea.sflag [#allocation9], %s96
          %s98 = sand.u32 %s33, 1
          %s99 = smul.addr %s98, 16
          %s100 = scalar_lea.vmem [#allocation8], %s99
          %s101 = smul.u32 2, %s19
          %s103 = ssub.s32 256, 256
          %104 = vsyncadd %s97, %s103
          %s105 = smul.addr %s18, 2
          %s106 = sadd.s32 %s101, %s105
          %s107 = smul.addr %s106, 128
          %s108 = scalar_lea.hbm %s0, %s107
          %s109 = sshll.u32 %s100, 4
          %s110 = int_to_ptr.vmem [resolvable:$true] %s109
          %115 = dma.hbm_to_vmem [thread:$0]  %s108, 256, %s110, %s97, 128, 128, 8
        $region28: #{tpu_custom_call.1} parent=23 // pred_fallthru
          _
      $region24: #{tpu_custom_call.1} parent=5 // pred_fallthru
        _
      %p116 = scmp.le.s32.totalorder 1, %s12
      // Predicated region
      $region29: #{tpu_custom_call.1} parent=5 // pred_check
        %p117 = pneg %p116
      $region30: #{tpu_custom_call.1} parent=5 // pred_check_branch
        %119 = sbr.rel (%p117) target = $region32
      $region31: #{tpu_custom_call.1} parent=5 // pred_region
        %s120 = ssub.s32 %s12, 1
        %s121 = sand.u32 %s36, 1
        %s122 = scalar_lea.sflag [#allocation9], %s121
        %s123 = sand.u32 %s36, 1
        %s124 = smul.addr %s123, 16
        %s125 = scalar_lea.vmem [#allocation8], %s124
        // Predicated region
        $region33: #{tpu_custom_call.1} parent=31 // pred_check
          %p126 = pneg %p49
        $region34: #{tpu_custom_call.1} parent=31 // pred_check_branch
          %128 = sbr.rel (%p126) target = $region36
        $region35: #{tpu_custom_call.1} parent=31 // pred_region
          %129 = dma.done %s122, 256
        $region36: #{tpu_custom_call.1} parent=31 // pred_fallthru
          _
        %s130 = sand.u32 %s36, 1
        %s131 = scalar_lea.sflag [#allocation9], %s130
        %s132 = sand.u32 %s36, 1
        %s133 = smul.addr %s132, 16
        %s134 = scalar_lea.vmem [#allocation8], %s133
        %p135 = pneg %p49
        %p136 = pneg %p45
        %p137 = pneg %p63
        %p138 = pneg %p59
        %p139 = pneg %p77
        %p140 = pneg %p73
        %s141 = smul.u32 2, %s21
        %p142 = scmp.lt.s32.totalorder %s21, 0
        %s143 = ssub.s32 0, %s21
        %s144 = scalar_select %p142, %s143, %s21
        %s145 = sand.u32 %s144, 1
        %s146 = ssub.s32 0, %s145
        %s147 = scalar_select %p142, %s146, %s145
        %p148 = scmp.ge.s32.totalorder %s21, 2
        // Predicated region
        $region37: #{tpu_custom_call.1} parent=31 // pred_check
          %p149 = pneg %p148
        $region38: #{tpu_custom_call.1} parent=31 // pred_check_branch
          %151 = sbr.rel (%p149) target = $region40
        $region39: #{tpu_custom_call.1} parent=31 // pred_region
          %s152 = ssub.s32 %s21, 2
          %s153 = smul.u32 %s152, 16
          %s154 = smul.u32 %s147, 4
          %s155 = scalar_lea.sflag [#allocation7], %s154
          %s156 = smul.u32 1, 16
          %s157 = smul.u32 %s156, 1
          %s158 = sshll.u32 %s157, 4
          %159 = dma.done %s155, %s158
          %s160 = smul.u32 %s152, 8
          %s161 = sadd.s32 %s160, 16
          %s162 = sadd.s32 1, %s154
          %s163 = scalar_lea.sflag [#allocation7], %s162
          %s164 = smul.u32 1, 8
          %s165 = smul.u32 %s164, 1
          %s166 = sshll.u32 %s165, 4
          %167 = dma.done %s163, %s166
          %s168 = sadd.s32 2, %s154
          %s169 = scalar_lea.sflag [#allocation7], %s168
          %s170 = smul.u32 1, 4
          %s171 = smul.u32 %s170, 1
          %s172 = sshll.u32 %s171, 4
          %173 = dma.done %s169, %s172
          %s174 = sadd.s32 3, %s154
          %s175 = scalar_lea.sflag [#allocation7], %s174
          %s176 = smul.u32 1, 2
          %s177 = smul.u32 %s176, 1
          %s178 = sshll.u32 %s177, 4
          %179 = dma.done %s175, %s178
        $region40: #{tpu_custom_call.1} parent=31 // pred_fallthru
          _
        %v180 = vld [vmem:[%s1] sm:$0x1]
        %v181 = vld [vmem:[%s2] sm:$0x1]
        %v182 = vld [vmem:[%s125] sm:$0xff]
        %v183 = vld [vmem:[%s125 + $0x8] sm:$0xff]
        %184 = vadd.xlane.f32.xlu0 %v182
        %v185 = vpop.xlane.xlu0 %184
        %186 = vadd.xlane.f32.xlu0 %v183
        %v187 = vpop.xlane.xlu0 %186
        %v188 = vrcp.pop 128.0
        %v189 = vmul.f32 %v185, %v188
        %v190 = vmul.f32 %v187, %v188
        %v191 = vsub.f32 %v182, %v189
        %v192 = vsub.f32 %v183, %v190
        %v193 = vmul.f32 %v191, %v191
        %v194 = vmul.f32 %v192, %v192
        %195 = vadd.xlane.f32.xlu0 %v193
        %v196 = vpop.xlane.xlu0 %195
        %197 = vadd.xlane.f32.xlu0 %v194
        %v198 = vpop.xlane.xlu0 %197
        %v199 = vmul.f32 %v196, %v188
        %v200 = vmul.f32 %v198, %v188
        %v201 = vadd.f32 %v199, 1e-05
        %v202 = vadd.f32 %v200, 1e-05
        %v203 = vrsqrt.pop %v201
        %v204 = vrsqrt.pop %v202
        %v205 = vmul.f32 %v191, %v203
        %v206 = vmul.f32 %v192, %v204
        %v208 = vlaneseq
        %v209 = vshrl.u32 %v208, 7
        %v210 = vsub.s32 0, %v209
        %v211 = vrot.slane %v180, %v210
        %v213 = vmul.f32 %v205, %v211
        %v214 = vmul.f32 %v206, %v211
        %v216 = vlaneseq
        %v217 = vshrl.u32 %v216, 7
        %v218 = vsub.s32 0, %v217
        %v219 = vrot.slane %v181, %v218
        %v221 = vadd.f32 %v213, %v219
        %v222 = vadd.f32 %v214, %v219
        %s223 = smul.u32 %s147, 16
        %s224 = scalar_lea.vmem [#allocation2], %s223
        %225 = vst [vmem:[%s224] sm:$0xff] %v221
        %226 = vst [vmem:[%s224 + $0x8] sm:$0xff] %v222
        %v227 = vld [vmem:[%s125] ss:$2 sm:$0xff]
        %s228 = scalar_lea.vmem %s125, 1 [#allocation8]
        %v229 = vld [vmem:[%s228] ss:$2 sm:$0xff]
        %v230 = vmax.f32 %v227, %v229
        %231 = vadd.xlane.f32.xlu0 %v230
        %v232 = vpop.xlane.xlu0 %231
        %v233 = vmul.f32 %v232, %v188
        %v234 = vsub.f32 %v230, %v233
        %v235 = vmul.f32 %v234, %v234
        %236 = vadd.xlane.f32.xlu0 %v235
        %v237 = vpop.xlane.xlu0 %236
        %v238 = vmul.f32 %v237, %v188
        %v239 = vadd.f32 %v238, 1e-05
        %v240 = vrsqrt.pop %v239
        %v241 = vmul.f32 %v234, %v240
        %v242 = vmul.f32 %v241, %v211
        %v243 = vadd.f32 %v242, %v219
        %s244 = smul.u32 %s147, 8
        %s245 = scalar_lea.vmem [#allocation3], %s244
        %246 = vst [vmem:[%s245] sm:$0xff] %v243
        %247 = vst [vmem:[#allocation6] sm:$0xff] %v230
        %v248 = vld [vmem:[#allocation6] ss:$2 sm:$0xf]
        %s249 = scalar_lea.vmem [#allocation6], 1
        %v250 = vld [vmem:[%s249] ss:$2 sm:$0xf]
        %v251 = vmax.f32 %v248, %v250
        %vm252 = vcmask 1043456
        %v253 = vsel %vm252, %v251, 0.0
        %254 = vadd.xlane.f32.xlu0 %v253
        %v255 = vpop.xlane.xlu0 %254
        %v256 = vmul.f32 %v255, %v188
        %v257 = vsub.f32 %v251, %v256
        %v258 = vmul.f32 %v257, %v257
        %v259 = vsel %vm252, %v258, 0.0
        %260 = vadd.xlane.f32.xlu0 %v259
        %v261 = vpop.xlane.xlu0 %260
        %v262 = vmul.f32 %v261, %v188
        %v263 = vadd.f32 %v262, 1e-05
        %v264 = vrsqrt.pop %v263
        %v265 = vmul.f32 %v257, %v264
        %v266 = vmul.f32 %v265, %v211
        %v267 = vadd.f32 %v266, %v219
        %s268 = smul.u32 %s147, 4
        %s269 = scalar_lea.vmem [#allocation4], %s268
        %270 = vst [vmem:[%s269] sm:$0xf] %v267
        %271 = vst [vmem:[#allocation6] sm:$0xf] %v251
        %v272 = vld [vmem:[#allocation6] ss:$2 sm:$0x3]
        %v273 = vld [vmem:[%s249] ss:$2 sm:$0x3]
        %v274 = vmax.f32 %v272, %v273
        %vm275 = vcmask 1041408
        %v276 = vsel %vm275, %v274, 0.0
        %277 = vadd.xlane.f32.xlu0 %v276
        %v278 = vpop.xlane.xlu0 %277
        %v279 = vmul.f32 %v278, %v188
        %v280 = vsub.f32 %v274, %v279
        %v281 = vmul.f32 %v280, %v280
        %v282 = vsel %vm275, %v281, 0.0
        %283 = vadd.xlane.f32.xlu0 %v282
        %v284 = vpop.xlane.xlu0 %283
        %v285 = vmul.f32 %v284, %v188
        %v286 = vadd.f32 %v285, 1e-05
        %v287 = vrsqrt.pop %v286
        %v288 = vmul.f32 %v280, %v287
        %v289 = vmul.f32 %v288, %v211
        %v290 = vadd.f32 %v289, %v219
        %s291 = smul.u32 %s147, 2
        %s292 = scalar_lea.vmem [#allocation5], %s291
        %293 = vst [vmem:[%s292] sm:$0x3] %v290
        %s294 = smul.u32 %s21, 16
        %s295 = smul.u32 %s20, 32
        %s296 = sadd.s32 %s294, %s295
        %s297 = scalar_lea.vmem %s3, %s296
        %s298 = scalar_lea.sflag [#allocation7], %s268
        %p300 = scmp.lt.u32.totalorder 16, 8
        %p301 = pneg %p300
        // Predicated region
        $region41: #{tpu_custom_call.1} parent=31 // pred_check
          _
        $region42: #{tpu_custom_call.1} parent=31 // pred_check_branch
          %303 = sbr.rel (%p300) target = $region44
        $region43: #{tpu_custom_call.1} parent=31 // pred_region
          %s319 = sand.u32 16, 7
          %p320 = scmp.eq.s32.totalorder %s319, 0
          // Predicated region
          $region56: #{tpu_custom_call.1} parent=43 // pred_check
            %p321 = pneg %p320
          $region57: #{tpu_custom_call.1} parent=43 // pred_check_branch
            %323 = sbr.rel (%p321) target = $region59
          $region58: #{tpu_custom_call.1} parent=43 // pred_region
            loop: start=0, step=1, limit=1
            $region60: #{tpu_custom_call.1} parent=58 // loop_pre_header
              _
            $region61: #{tpu_custom_call.1} parent=58 // loop_header
              %s325 = sphi 0, %s329
              %p326 = scmp.ge.s32.totalorder %s325, 1
              %s330 = sphi %s224, %s224
              %s331 = sphi %s297, %s297
            $region62: #{tpu_custom_call.1} parent=58 // loop_header_branch
              %328 = sbr.rel (%p326) target = $region66
            $region63: #{tpu_custom_call.1} parent=58 // loop_body
              %v332 = vld [vmem:[%s330] sm:$0xff]
              %333 = vst [vmem:[%s331] sm:$0xff] %v332
              %v334 = vld [vmem:[%s330 + $0x8] sm:$0xff]
              %335 = vst [vmem:[%s331 + $0x8] sm:$0xff] %v334
            $region64: #{tpu_custom_call.1} parent=58 // loop_footer
              %s329 = sadd.s32 1, %s325
            $region65: #{tpu_custom_call.1} parent=58 // loop_footer_branch
              %324 = sbr.rel target = $region61
            $region66: #{tpu_custom_call.1} parent=58 // loop_exit
              _
          $region59: #{tpu_custom_call.1} parent=43 // pred_fallthru
            _
          %p336 = pneg %p320
          // Predicated region
          $region67: #{tpu_custom_call.1} parent=43 // pred_check
            _
          $region68: #{tpu_custom_call.1} parent=43 // pred_check_branch
            %338 = sbr.rel (%p320) target = $region70
          $region69: #{tpu_custom_call.1} parent=43 // pred_region
            %s339 = sand.u32 16, 7
          $region70: #{tpu_custom_call.1} parent=43 // pred_fallthru
            _
        $region44: #{tpu_custom_call.1} parent=31 // pred_fallthru
          _
        // Predicated region
        $region45: #{tpu_custom_call.1} parent=31 // pred_check
          %p304 = pneg %p300
        $region46: #{tpu_custom_call.1} parent=31 // pred_check_branch
          %306 = sbr.rel (%p304) target = $region48
        $region47: #{tpu_custom_call.1} parent=31 // pred_region
          %s307 = sshll.u32 1, 16
          %s308 = ssub.s32 %s307, 1
          loop: start=0, step=1, limit=1
          $region49: #{tpu_custom_call.1} parent=47 // loop_pre_header
            _
          $region50: #{tpu_custom_call.1} parent=47 // loop_header
            %s310 = sphi 0, %s314
            %p311 = scmp.ge.s32.totalorder %s310, 1
            %s315 = sphi %s224, %s224
            %s316 = sphi %s297, %s297
          $region51: #{tpu_custom_call.1} parent=47 // loop_header_branch
            %313 = sbr.rel (%p311) target = $region55
          $region52: #{tpu_custom_call.1} parent=47 // loop_body
            %v317 = vld [vmem:[%s315] sm:%s308]
            %318 = vst [vmem:[%s316] sm:%s308] %v317
          $region53: #{tpu_custom_call.1} parent=47 // loop_footer
            %s314 = sadd.s32 1, %s310
          $region54: #{tpu_custom_call.1} parent=47 // loop_footer_branch
            %309 = sbr.rel target = $region50
          $region55: #{tpu_custom_call.1} parent=47 // loop_exit
            _
        $region48: #{tpu_custom_call.1} parent=31 // pred_fallthru
          _
        // Predicated region
        $region71: #{tpu_custom_call.1} parent=31 // pred_check
          _
        $region72: #{tpu_custom_call.1} parent=31 // pred_check_branch
          %342 = sbr.rel (0) target = $region74
        $region73: #{tpu_custom_call.1} parent=31 // pred_region
          %343 = vsyncadd %s298, 256
        $region74: #{tpu_custom_call.1} parent=31 // pred_fallthru
          _
        %s344 = smul.u32 %s21, 8
        %s345 = sadd.s32 %s344, 16
        %s346 = sadd.s32 %s345, %s295
        %s347 = scalar_lea.vmem %s3, %s346
        %s348 = sadd.s32 1, %s268
        %s349 = scalar_lea.sflag [#allocation7], %s348
        %p351 = scmp.lt.u32.totalorder 8, 8
        %p352 = pneg %p351
        // Predicated region
        $region75: #{tpu_custom_call.1} parent=31 // pred_check
          _
        $region76: #{tpu_custom_call.1} parent=31 // pred_check_branch
          %354 = sbr.rel (%p351) target = $region78
        $region77: #{tpu_custom_call.1} parent=31 // pred_region
          %s370 = sand.u32 8, 7
          %p371 = scmp.eq.s32.totalorder %s370, 0
          // Predicated region
          $region90: #{tpu_custom_call.1} parent=77 // pred_check
            %p372 = pneg %p371
          $region91: #{tpu_custom_call.1} parent=77 // pred_check_branch
            %374 = sbr.rel (%p372) target = $region93
          $region92: #{tpu_custom_call.1} parent=77 // pred_region
            loop: start=0, step=1, limit=1
            $region94: #{tpu_custom_call.1} parent=92 // loop_pre_header
              _
            $region95: #{tpu_custom_call.1} parent=92 // loop_header
              %s376 = sphi 0, %s380
              %p377 = scmp.ge.s32.totalorder %s376, 1
              %s381 = sphi %s245, %s245
              %s382 = sphi %s347, %s347
            $region96: #{tpu_custom_call.1} parent=92 // loop_header_branch
              %379 = sbr.rel (%p377) target = $region100
            $region97: #{tpu_custom_call.1} parent=92 // loop_body
              %v383 = vld [vmem:[%s381] sm:$0xff]
              %384 = vst [vmem:[%s382] sm:$0xff] %v383
            $region98: #{tpu_custom_call.1} parent=92 // loop_footer
              %s380 = sadd.s32 1, %s376
            $region99: #{tpu_custom_call.1} parent=92 // loop_footer_branch
              %375 = sbr.rel target = $region95
            $region100: #{tpu_custom_call.1} parent=92 // loop_exit
              _
          $region93: #{tpu_custom_call.1} parent=77 // pred_fallthru
            _
          %p385 = pneg %p371
          // Predicated region
          $region101: #{tpu_custom_call.1} parent=77 // pred_check
            _
          $region102: #{tpu_custom_call.1} parent=77 // pred_check_branch
            %387 = sbr.rel (%p371) target = $region104
          $region103: #{tpu_custom_call.1} parent=77 // pred_region
            %s388 = sand.u32 8, 7
          $region104: #{tpu_custom_call.1} parent=77 // pred_fallthru
            _
        $region78: #{tpu_custom_call.1} parent=31 // pred_fallthru
          _
        // Predicated region
        $region79: #{tpu_custom_call.1} parent=31 // pred_check
          %p355 = pneg %p351
        $region80: #{tpu_custom_call.1} parent=31 // pred_check_branch
          %357 = sbr.rel (%p355) target = $region82
        $region81: #{tpu_custom_call.1} parent=31 // pred_region
          %s358 = sshll.u32 1, 8
          %s359 = ssub.s32 %s358, 1
          loop: start=0, step=1, limit=1
          $region83: #{tpu_custom_call.1} parent=81 // loop_pre_header
            _
          $region84: #{tpu_custom_call.1} parent=81 // loop_header
            %s361 = sphi 0, %s365
            %p362 = scmp.ge.s32.totalorder %s361, 1
            %s366 = sphi %s245, %s245
            %s367 = sphi %s347, %s347
          $region85: #{tpu_custom_call.1} parent=81 // loop_header_branch
            %364 = sbr.rel (%p362) target = $region89
          $region86: #{tpu_custom_call.1} parent=81 // loop_body
            %v368 = vld [vmem:[%s366] sm:%s359]
            %369 = vst [vmem:[%s367] sm:%s359] %v368
          $region87: #{tpu_custom_call.1} parent=81 // loop_footer
            %s365 = sadd.s32 1, %s361
          $region88: #{tpu_custom_call.1} parent=81 // loop_footer_branch
            %360 = sbr.rel target = $region84
          $region89: #{tpu_custom_call.1} parent=81 // loop_exit
            _
        $region82: #{tpu_custom_call.1} parent=31 // pred_fallthru
          _
        // Predicated region
        $region105: #{tpu_custom_call.1} parent=31 // pred_check
          _
        $region106: #{tpu_custom_call.1} parent=31 // pred_check_branch
          %391 = sbr.rel (0) target = $region108
        $region107: #{tpu_custom_call.1} parent=31 // pred_region
          %392 = vsyncadd %s349, 128
        $region108: #{tpu_custom_call.1} parent=31 // pred_fallthru
          _
        %s393 = smul.u32 %s21, 4
        %s394 = sadd.s32 %s393, 24
        %s395 = sadd.s32 %s394, %s295
        %s396 = scalar_lea.vmem %s3, %s395
        %s397 = sadd.s32 2, %s268
        %s398 = scalar_lea.sflag [#allocation7], %s397
        %p400 = scmp.lt.u32.totalorder 4, 8
        %p401 = pneg %p400
        // Predicated region
        $region109: #{tpu_custom_call.1} parent=31 // pred_check
          _
        $region110: #{tpu_custom_call.1} parent=31 // pred_check_branch
          %403 = sbr.rel (%p400) target = $region112
        $region111: #{tpu_custom_call.1} parent=31 // pred_region
          %s419 = sand.u32 4, 7
          %p420 = scmp.eq.s32.totalorder %s419, 0
          %p421 = pneg %p420
          // Predicated region
          $region124: #{tpu_custom_call.1} parent=111 // pred_check
            _
          $region125: #{tpu_custom_call.1} parent=111 // pred_check_branch
            %423 = sbr.rel (%p420) target = $region127
          $region126: #{tpu_custom_call.1} parent=111 // pred_region
            %s424 = sand.u32 4, 7
            %s425 = ssub.s32 4, %s424
            %s426 = scalar_lea.vmem %s269, %s425 [#allocation4]
            %s427 = ssub.s32 4, %s424
            %s428 = scalar_lea.vmem %s396, %s427
            %s429 = sshll.u32 1, %s424
            %s430 = ssub.s32 %s429, 1
            loop: start=0, step=1, limit=1
            $region128: #{tpu_custom_call.1} parent=126 // loop_pre_header
              _
            $region129: #{tpu_custom_call.1} parent=126 // loop_header
              %s432 = sphi 0, %s436
              %p433 = scmp.ge.s32.totalorder %s432, 1
              %s437 = sphi %s426, %s426
              %s438 = sphi %s428, %s428
            $region130: #{tpu_custom_call.1} parent=126 // loop_header_branch
              %435 = sbr.rel (%p433) target = $region134
            $region131: #{tpu_custom_call.1} parent=126 // loop_body
              %v439 = vld [vmem:[%s437] sm:%s430]
              %440 = vst [vmem:[%s438] sm:%s430] %v439
            $region132: #{tpu_custom_call.1} parent=126 // loop_footer
              %s436 = sadd.s32 1, %s432
            $region133: #{tpu_custom_call.1} parent=126 // loop_footer_branch
              %431 = sbr.rel target = $region129
            $region134: #{tpu_custom_call.1} parent=126 // loop_exit
              _
          $region127: #{tpu_custom_call.1} parent=111 // pred_fallthru
            _
        $region112: #{tpu_custom_call.1} parent=31 // pred_fallthru
          _
        // Predicated region
        $region113: #{tpu_custom_call.1} parent=31 // pred_check
          %p404 = pneg %p400
        $region114: #{tpu_custom_call.1} parent=31 // pred_check_branch
          %406 = sbr.rel (%p404) target = $region116
        $region115: #{tpu_custom_call.1} parent=31 // pred_region
          %s407 = sshll.u32 1, 4
          %s408 = ssub.s32 %s407, 1
          loop: start=0, step=1, limit=1
          $region117: #{tpu_custom_call.1} parent=115 // loop_pre_header
            _
          $region118: #{tpu_custom_call.1} parent=115 // loop_header
            %s410 = sphi 0, %s414
            %p411 = scmp.ge.s32.totalorder %s410, 1
            %s415 = sphi %s269, %s269
            %s416 = sphi %s396, %s396
          $region119: #{tpu_custom_call.1} parent=115 // loop_header_branch
            %413 = sbr.rel (%p411) target = $region123
          $region120: #{tpu_custom_call.1} parent=115 // loop_body
            %v417 = vld [vmem:[%s415] sm:%s408]
            %418 = vst [vmem:[%s416] sm:%s408] %v417
          $region121: #{tpu_custom_call.1} parent=115 // loop_footer
            %s414 = sadd.s32 1, %s410
          $region122: #{tpu_custom_call.1} parent=115 // loop_footer_branch
            %409 = sbr.rel target = $region118
          $region123: #{tpu_custom_call.1} parent=115 // loop_exit
            _
        $region116: #{tpu_custom_call.1} parent=31 // pred_fallthru
          _
        // Predicated region
        $region135: #{tpu_custom_call.1} parent=31 // pred_check
          _
        $region136: #{tpu_custom_call.1} parent=31 // pred_check_branch
          %443 = sbr.rel (0) target = $region138
        $region137: #{tpu_custom_call.1} parent=31 // pred_region
          %444 = vsyncadd %s398, 64
        $region138: #{tpu_custom_call.1} parent=31 // pred_fallthru
          _
        %s445 = smul.u32 %s21, 2
        %s446 = sadd.s32 %s445, 28
        %s447 = sadd.s32 %s446, %s295
        %s448 = scalar_lea.vmem %s3, %s447
        %s449 = sadd.s32 3, %s268
        %s450 = scalar_lea.sflag [#allocation7], %s449
        %p452 = scmp.lt.u32.totalorder 2, 8
        %p453 = pneg %p452
        // Predicated region
        $region139: #{tpu_custom_call.1} parent=31 // pred_check
          _
        $region140: #{tpu_custom_call.1} parent=31 // pred_check_branch
          %455 = sbr.rel (%p452) target = $region142
        $region141: #{tpu_custom_call.1} parent=31 // pred_region
          %s471 = sand.u32 2, 7
          %p472 = scmp.eq.s32.totalorder %s471, 0
          %p473 = pneg %p472
          // Predicated region
          $region154: #{tpu_custom_call.1} parent=141 // pred_check
            _
          $region155: #{tpu_custom_call.1} parent=141 // pred_check_branch
            %475 = sbr.rel (%p472) target = $region157
          $region156: #{tpu_custom_call.1} parent=141 // pred_region
            %s476 = sand.u32 2, 7
            %s477 = ssub.s32 2, %s476
            %s478 = scalar_lea.vmem %s292, %s477 [#allocation5]
            %s479 = ssub.s32 2, %s476
            %s480 = scalar_lea.vmem %s448, %s479
            %s481 = sshll.u32 1, %s476
            %s482 = ssub.s32 %s481, 1
            loop: start=0, step=1, limit=1
            $region158: #{tpu_custom_call.1} parent=156 // loop_pre_header
              _
            $region159: #{tpu_custom_call.1} parent=156 // loop_header
              %s484 = sphi 0, %s488
              %p485 = scmp.ge.s32.totalorder %s484, 1
              %s489 = sphi %s478, %s478
              %s490 = sphi %s480, %s480
            $region160: #{tpu_custom_call.1} parent=156 // loop_header_branch
              %487 = sbr.rel (%p485) target = $region164
            $region161: #{tpu_custom_call.1} parent=156 // loop_body
              %v491 = vld [vmem:[%s489] sm:%s482]
              %492 = vst [vmem:[%s490] sm:%s482] %v491
            $region162: #{tpu_custom_call.1} parent=156 // loop_footer
              %s488 = sadd.s32 1, %s484
            $region163: #{tpu_custom_call.1} parent=156 // loop_footer_branch
              %483 = sbr.rel target = $region159
            $region164: #{tpu_custom_call.1} parent=156 // loop_exit
              _
          $region157: #{tpu_custom_call.1} parent=141 // pred_fallthru
            _
        $region142: #{tpu_custom_call.1} parent=31 // pred_fallthru
          _
        // Predicated region
        $region143: #{tpu_custom_call.1} parent=31 // pred_check
          %p456 = pneg %p452
        $region144: #{tpu_custom_call.1} parent=31 // pred_check_branch
          %458 = sbr.rel (%p456) target = $region146
        $region145: #{tpu_custom_call.1} parent=31 // pred_region
          %s459 = sshll.u32 1, 2
          %s460 = ssub.s32 %s459, 1
          loop: start=0, step=1, limit=1
          $region147: #{tpu_custom_call.1} parent=145 // loop_pre_header
            _
          $region148: #{tpu_custom_call.1} parent=145 // loop_header
            %s462 = sphi 0, %s466
            %p463 = scmp.ge.s32.totalorder %s462, 1
            %s467 = sphi %s292, %s292
            %s468 = sphi %s448, %s448
          $region149: #{tpu_custom_call.1} parent=145 // loop_header_branch
            %465 = sbr.rel (%p463) target = $region153
          $region150: #{tpu_custom_call.1} parent=145 // loop_body
            %v469 = vld [vmem:[%s467] sm:%s460]
            %470 = vst [vmem:[%s468] sm:%s460] %v469
          $region151: #{tpu_custom_call.1} parent=145 // loop_footer
            %s466 = sadd.s32 1, %s462
          $region152: #{tpu_custom_call.1} parent=145 // loop_footer_branch
            %461 = sbr.rel target = $region148
          $region153: #{tpu_custom_call.1} parent=145 // loop_exit
            _
        $region146: #{tpu_custom_call.1} parent=31 // pred_fallthru
          _
        // Predicated region
        $region165: #{tpu_custom_call.1} parent=31 // pred_check
          _
        $region166: #{tpu_custom_call.1} parent=31 // pred_check_branch
          %495 = sbr.rel (0) target = $region168
        $region167: #{tpu_custom_call.1} parent=31 // pred_region
          %496 = vsyncadd %s450, 32
        $region168: #{tpu_custom_call.1} parent=31 // pred_fallthru
          _
        %p497 = scmp.eq.s32.totalorder %s21, 0
        // Predicated region
        $region169: #{tpu_custom_call.1} parent=31 // pred_check
          %p498 = pneg %p497
        $region170: #{tpu_custom_call.1} parent=31 // pred_check_branch
          %500 = sbr.rel (%p498) target = $region172
        $region171: #{tpu_custom_call.1} parent=31 // pred_region
          %s501 = smul.u32 1, 16
          %s502 = smul.u32 %s501, 1
          %s503 = sshll.u32 %s502, 4
          %504 = dma.done %s298, %s503
          %s505 = smul.u32 1, 8
          %s506 = smul.u32 %s505, 1
          %s507 = sshll.u32 %s506, 4
          %508 = dma.done %s349, %s507
          %s509 = smul.u32 1, 4
          %s510 = smul.u32 %s509, 1
          %s511 = sshll.u32 %s510, 4
          %512 = dma.done %s398, %s511
          %s513 = smul.u32 1, 2
          %s514 = smul.u32 %s513, 1
          %s515 = sshll.u32 %s514, 4
          %516 = dma.done %s450, %s515
        $region172: #{tpu_custom_call.1} parent=31 // pred_fallthru
          _
      $region32: #{tpu_custom_call.1} parent=5 // pred_fallthru
        _
    $region6: #{tpu_custom_call.1} parent=1 // loop_footer
      %s16 = sadd.s32 1, %s12
    $region7: #{tpu_custom_call.1} parent=1 // loop_footer_branch
      %11 = sbr.rel target = $region3
    $region8: #{tpu_custom_call.1} parent=1 // loop_exit
      _
    %517 = vsyncpa [#allocation9], 1
    %s518 = scalar_lea.sflag [#allocation9], 1
    %519 = vsyncpa %s518, 1
  %520 = vsyncmov [#allocation7]
  %s521 = vpop.sfrf %520
  %p522 = scmp.eq.s32.totalorder %s521, 0
  %p523 = pneg %p522
  %525 = shalt.err (%p523)
  %s526 = scalar_lea.sflag [#allocation7], 1
  %527 = vsyncmov %s526
  %s528 = vpop.sfrf %527
  %p529 = scmp.eq.s32.totalorder %s528, 0
  %p530 = pneg %p529
  %532 = shalt.err (%p530)
  %s533 = scalar_lea.sflag [#allocation7], 2
  %534 = vsyncmov %s533
  %s535 = vpop.sfrf %534
  %p536 = scmp.eq.s32.totalorder %s535, 0
  %p537 = pneg %p536
  %539 = shalt.err (%p537)
  %s540 = scalar_lea.sflag [#allocation7], 3
  %541 = vsyncmov %s540
  %s542 = vpop.sfrf %541
  %p543 = scmp.eq.s32.totalorder %s542, 0
  %p544 = pneg %p543
  %546 = shalt.err (%p544)
  %s547 = scalar_lea.sflag [#allocation7], 4
  %548 = vsyncmov %s547
  %s549 = vpop.sfrf %548
  %p550 = scmp.eq.s32.totalorder %s549, 0
  %p551 = pneg %p550
  %553 = shalt.err (%p551)
  %s554 = scalar_lea.sflag [#allocation7], 5
  %555 = vsyncmov %s554
  %s556 = vpop.sfrf %555
  %p557 = scmp.eq.s32.totalorder %s556, 0
  %p558 = pneg %p557
  %560 = shalt.err (%p558)
  %s561 = scalar_lea.sflag [#allocation7], 6
  %562 = vsyncmov %s561
  %s563 = vpop.sfrf %562
  %p564 = scmp.eq.s32.totalorder %s563, 0
  %p565 = pneg %p564
  %567 = shalt.err (%p565)
  %s568 = scalar_lea.sflag [#allocation7], 7
  %569 = vsyncmov %s568
  %s570 = vpop.sfrf %569
  %p571 = scmp.eq.s32.totalorder %s570, 0
  %p572 = pneg %p571
  %574 = shalt.err (%p572)

</llo_original>
